<compile_context>
chip_gen: v7x
topology: tpu7x:2x2x1
jax: 0.10.0
libtpu: 0.0.40
codegen_flags: <defaults>
</compile_context>

<pallas_src>
import jax
import jax.numpy as jnp
from jax.experimental import pallas as pl
from jax.experimental.pallas import tpu as pltpu

_HIDDEN = 128   # affine1 out_features
_K_AUG = 8      # 4 obs features + 1 ones row (bias) + 3 zero rows (sublane alignment)
_CHUNK = 512    # lanes (batch elements) processed per inner step


def _make_policy_kernel(tb: int, chunk: int):
    """Build the kernel for a static batch-tile width `tb` (lane axis)."""

    if tb <= chunk:
        # Small tile: single pass, no inner chunk loop.
        def kernel(x_ref, w1a_ref, w2d_ref, b2d_ref, o_ref):
            # Layer 1 (+bias via ones row) on the MXU, f32 accumulation.
            h = jnp.dot(w1a_ref[...], x_ref[...],
                        preferred_element_type=jnp.float32)        # (128, tb)
            h = jnp.maximum(h, 0.0)                                 # ReLU (VPU)
            # Folded layer 2: 2-class softmax == sigmoid(logit_1 - logit_0).
            d = jnp.dot(w2d_ref[...], h,
                        preferred_element_type=jnp.float32)         # (1, tb)
            d = d + b2d_ref[...]
            p1 = 0.5 * (jnp.tanh(0.5 * d) + 1.0)                    # sigmoid via EUP tanh
            o_ref[0:1, :] = 1.0 - p1
            o_ref[1:2, :] = p1
        return kernel

    assert tb % chunk == 0, "batch tile must be a multiple of the lane chunk"
    n_chunks = tb // chunk

    def kernel(x_ref, w1a_ref, w2d_ref, b2d_ref, o_ref):
        w1a = w1a_ref[...]                                           # (128, 8) resident
        w2d = w2d_ref[...]                                           # (1, 128)
        # Hoist the bias broadcast out of the loop (broadcast_in_dim is not CSE'd).
        b2b = pl.broadcast_to(b2d_ref[...], (1, chunk))

        @pl.loop(0, n_chunks)
        def _(c):
            start = pl.multiple_of(c * chunk, chunk)
            xc = x_ref[:, pl.ds(start, chunk)]                       # (8, chunk)
            h = jnp.dot(w1a, xc, preferred_element_type=jnp.float32)  # (128, chunk) MXU
            h = jnp.maximum(h, 0.0)                                   # ReLU
            d = jnp.dot(w2d, h, preferred_element_type=jnp.float32) + b2b  # (1, chunk)
            p1 = 0.5 * (jnp.tanh(0.5 * d) + 1.0)                      # sigmoid
            o_ref[0:1, pl.ds(start, chunk)] = 1.0 - p1                # lane-dense stores
            o_ref[1:2, pl.ds(start, chunk)] = p1

    return kernel


def _round_up(x, m):
    return ((x + m - 1) // m) * m


def _choose_tile(B, tb_max, chunk):
    """Batch-tile width: full batch when small; otherwise >= 2 grid steps
    (so v7x's two TensorCores both get work), capped at tb_max, multiple of
    `chunk` (hence of 128, satisfying the lane constraint)."""
    if B <= chunk:
        return B
    tb_max = max(chunk, (tb_max // chunk) * chunk)
    return min(tb_max, _round_up(-(-B // 2), chunk))


def policy_forward_lane_major(x_aug, w1a, w2d, b2d, *, tb_max=8192, chunk=_CHUNK):
    """Transposed (lane-dense) entry point — no HBM transpose round-trips.

    x_aug: (8, B)   rows 0..3 = observation features, row 4 = ones, rows 5..7 = zeros
    w1a:   (128, 8) [W1 | b1 | 0 0 0]
    w2d:   (1, 128) (w2[:,1] - w2[:,0])^T
    b2d:   (1, 1)   b2[1] - b2[0]
    Returns (2, B): row 0 = P(action 0), row 1 = P(action 1).
    """
    B = x_aug.shape[1]
    tb = _choose_tile(B, tb_max, chunk)
    grid = (pl.cdiv(B, tb),)          # ragged last block handled by Pallas masking

    return pl.pallas_call(
        _make_policy_kernel(tb, chunk),
        out_shape=jax.ShapeDtypeStruct((2, B), jnp.float32),
        grid_spec=pltpu.PrefetchScalarGridSpec(
            num_scalar_prefetch=0,
            grid=grid,
            in_specs=[
                pl.BlockSpec((_K_AUG, tb), lambda i: (0, i)),        # x tile (batch on lanes)
                pl.BlockSpec((_HIDDEN, _K_AUG), lambda i: (0, 0)),   # weights stay VMEM-resident
                pl.BlockSpec((1, _HIDDEN), lambda i: (0, 0)),
                pl.BlockSpec((1, 1), lambda i: (0, 0)),
            ],
            out_specs=pl.BlockSpec((2, tb), lambda i: (0, i)),
        ),
        compiler_params=pltpu.CompilerParams(
            dimension_semantics=("parallel",),   # shard batch tiles across TCs (v7x)
        ),
    )(x_aug, w1a, w2d, b2d)


def fold_params(w1, b1, w2, b2):
    """Fold params (stored as (in, out)) into the kernel operands (once per update)."""
    w1a = jnp.concatenate(
        [w1.T, b1.reshape(_HIDDEN, 1),
         jnp.zeros((_HIDDEN, _K_AUG - 5), jnp.float32)], axis=1)     # (128, 8)
    w2d = (w2[:, 1:2] - w2[:, 0:1]).T                                 # (1, 128)
    b2d = b2[:, 1:2] - b2[:, 0:1]                                     # (1, 1)
    return w1a, w2d, b2d


def policy_forward(x, w1, b1, w2, b2, *, tb_max=8192):
    """PyTorch-matching API: x (B, 4) -> softmax probabilities (B, 2)."""
    B = x.shape[0]
    w1a, w2d, b2d = fold_params(w1, b1, w2, b2)
    # Lane-dense layout: batch on lanes.  The ones row folds the bias into the
    # matmul; zero rows pad the contraction depth to a sublane-aligned 8.
    x_aug = jnp.concatenate(
        [x.T, jnp.ones((1, B), x.dtype), jnp.zeros((3, B), x.dtype)], axis=0)  # (8, B)
    out_t = policy_forward_lane_major(x_aug, w1a, w2d, b2d, tb_max=tb_max)
    return out_t.T                                                    # (B, 2)


def init_params(key):
    """Deterministic init mimicking nn.Linear default (uniform +-1/sqrt(fan_in))."""
    k1, k2, k3, k4 = jax.random.split(key, 4)
    bound1 = 1.0 / jnp.sqrt(4.0)
    bound2 = 1.0 / jnp.sqrt(128.0)
    # Stored as (in_features, out_features), i.e. already transposed vs. PyTorch.
    w1 = jax.random.uniform(k1, (4, 128), jnp.float32, -bound1, bound1)
    b1 = jax.random.uniform(k2, (1, 128), jnp.float32, -bound1, bound1)
    w2 = jax.random.uniform(k3, (128, 2), jnp.float32, -bound2, bound2)
    b2 = jax.random.uniform(k4, (1, 2), jnp.float32, -bound2, bound2)
    return w1, b1, w2, b2


def reference_forward(x, w1, b1, w2, b2):
    h = jnp.maximum(x @ w1 + b1, 0.0)
    logits = h @ w2 + b2
    return jax.nn.softmax(logits, axis=1)


if __name__ == "__main__":
    key = jax.random.PRNGKey(0)
    kx, kp, kbig = jax.random.split(key, 3)

    w1, b1, w2, b2 = init_params(kp)

    # Small online-inference case (CartPole observations are 4-dimensional):
    # single full-extent block, grid = 1, non-chunked kernel path.
    batch = 8
    x = jax.random.normal(kx, (batch, 4), jnp.float32)
    out = jax.block_until_ready(policy_forward(x, w1, b1, w2, b2))
    ref = reference_forward(x, w1, b1, w2, b2)
    assert out.shape == (batch, 2)
    assert jnp.allclose(out, ref, atol=2e-5, rtol=2e-5)
    assert jnp.allclose(jnp.sum(out, axis=1), jnp.ones((batch,)), atol=2e-5)

    # Larger batch exercising the tiled path: tb = 1024 -> grid = 2 ("parallel"
    # axis feeds both v7x TCs), in-kernel 512-lane chunk loop, and a ragged
    # (masked) last block with no wrapper-side padding.
    big_batch = 1500
    xb = jax.random.normal(kbig, (big_batch, 4), jnp.float32)
    outb = jax.block_until_ready(policy_forward(xb, w1, b1, w2, b2))
    refb = reference_forward(xb, w1, b1, w2, b2)
    assert outb.shape == (big_batch, 2)
    assert jnp.allclose(outb, refb, atol=2e-5, rtol=2e-5)
    assert jnp.allclose(jnp.sum(outb, axis=1), jnp.ones((big_batch,)), atol=2e-5)

    print("KERNEL_OK")
</pallas_src>

<mosaic_0001>
module attributes {stable_mosaic.version = 11 : i64} {
  func.func @kernel(%arg0: i32, %arg1: memref<8x8xf32, #tpu.memory_space<vmem>>, %arg2: memref<128x8xf32, #tpu.memory_space<vmem>>, %arg3: memref<1x128xf32, #tpu.memory_space<vmem>>, %arg4: memref<1x1xf32, #tpu.memory_space<vmem>>, %arg5: memref<2x8xf32, #tpu.memory_space<vmem>>) attributes {dimension_semantics = [#tpu.dimension_semantics<parallel>], iteration_bounds = array<i64: 1>, scalar_prefetch = 0 : i64, scratch_operands = 0 : i64, tpu.core_type = #tpu.core_type<tc>, window_params = [{transform_indices = @transform_0, window_bounds = array<i64: 8, 8>}, {pipeline_mode = #tpu.pipeline_mode<synchronous>, transform_indices = @transform_1, window_bounds = array<i64: 128, 8>}, {pipeline_mode = #tpu.pipeline_mode<synchronous>, transform_indices = @transform_2, window_bounds = array<i64: 1, 128>}, {pipeline_mode = #tpu.pipeline_mode<synchronous>, transform_indices = @transform_3, window_bounds = array<i64: 1, 1>}, {transform_indices = @transform_4, window_bounds = array<i64: 2, 8>}]} {
    %c0 = arith.constant 0 : index
    %c0_0 = arith.constant 0 : index
    %0 = vector.load %arg2[%c0, %c0_0] : memref<128x8xf32, #tpu.memory_space<vmem>>, vector<128x8xf32>
    %c0_1 = arith.constant 0 : index
    %c0_2 = arith.constant 0 : index
    %1 = vector.load %arg1[%c0_1, %c0_2] : memref<8x8xf32, #tpu.memory_space<vmem>>, vector<8x8xf32>
    %cst = arith.constant dense<0.000000e+00> : vector<128x8xf32>
    %2 = tpu.matmul %0, %1, %cst {dimension_numbers = #tpu.dot_dimension_numbers<[1], [0], [0], [1], [0, 0, 1, 1], [], []>} : vector<128x8xf32>, vector<8x8xf32>, vector<128x8xf32> -> vector<128x8xf32>
    %cst_3 = arith.constant 0.000000e+00 : f32
    %3 = vector.broadcast %cst_3 : f32 to vector<128x8xf32>
    %4 = arith.maximumf %2, %3 : vector<128x8xf32>
    %c0_4 = arith.constant 0 : index
    %c0_5 = arith.constant 0 : index
    %5 = vector.load %arg3[%c0_4, %c0_5] : memref<1x128xf32, #tpu.memory_space<vmem>>, vector<1x128xf32>
    %cst_6 = arith.constant dense<0.000000e+00> : vector<1x8xf32>
    %6 = tpu.matmul %5, %4, %cst_6 {dimension_numbers = #tpu.dot_dimension_numbers<[1], [0], [0], [1], [0, 0, 1, 1], [], []>} : vector<1x128xf32>, vector<128x8xf32>, vector<1x8xf32> -> vector<1x8xf32>
    %c0_7 = arith.constant 0 : index
    %c0_8 = arith.constant 0 : index
    %7 = vector.load %arg4[%c0_7, %c0_8] : memref<1x1xf32, #tpu.memory_space<vmem>>, vector<1x1xf32>
    %8 = vector.broadcast %7 : vector<1x1xf32> to vector<1x8xf32>
    %9 = arith.addf %6, %8 : vector<1x8xf32>
    %cst_9 = arith.constant 5.000000e-01 : f32
    %10 = vector.broadcast %cst_9 : f32 to vector<1x8xf32>
    %11 = arith.mulf %10, %9 : vector<1x8xf32>
    %12 = math.tanh %11 : vector<1x8xf32>
    %cst_10 = arith.constant 1.000000e+00 : f32
    %13 = vector.broadcast %cst_10 : f32 to vector<1x8xf32>
    %14 = arith.addf %12, %13 : vector<1x8xf32>
    %cst_11 = arith.constant 5.000000e-01 : f32
    %15 = vector.broadcast %cst_11 : f32 to vector<1x8xf32>
    %16 = arith.mulf %15, %14 : vector<1x8xf32>
    %cst_12 = arith.constant 1.000000e+00 : f32
    %17 = vector.broadcast %cst_12 : f32 to vector<1x8xf32>
    %18 = arith.subf %17, %16 : vector<1x8xf32>
    %c0_13 = arith.constant 0 : index
    %c0_14 = arith.constant 0 : index
    %19 = vector.load %arg5[%c0_13, %c0_14] : memref<2x8xf32, #tpu.memory_space<vmem>>, vector<1x8xf32>
    tpu.vector_store %arg5[%c0_13, %c0_14], %18 {strides = array<i32>} : memref<2x8xf32, #tpu.memory_space<vmem>>, vector<1x8xf32>,
    %c1 = arith.constant 1 : index
    %c0_15 = arith.constant 0 : index
    %20 = vector.load %arg5[%c1, %c0_15] : memref<2x8xf32, #tpu.memory_space<vmem>>, vector<1x8xf32>
    tpu.vector_store %arg5[%c1, %c0_15], %16 {strides = array<i32>} : memref<2x8xf32, #tpu.memory_space<vmem>>, vector<1x8xf32>,
    return
  }
  func.func @transform_0(%arg0: i32) -> (i32, i32) {
    %c0_i32 = arith.constant 0 : i32
    %c0_i32_0 = arith.constant 0 : i32
    return %c0_i32, %arg0 : i32, i32
  }
  func.func @transform_1(%arg0: i32) -> (i32, i32) {
    %c0_i32 = arith.constant 0 : i32
    %c0_i32_0 = arith.constant 0 : i32
    %c0_i32_1 = arith.constant 0 : i32
    return %c0_i32, %c0_i32_0 : i32, i32
  }
  func.func @transform_2(%arg0: i32) -> (i32, i32) {
    %c0_i32 = arith.constant 0 : i32
    %c0_i32_0 = arith.constant 0 : i32
    %c0_i32_1 = arith.constant 0 : i32
    return %c0_i32, %c0_i32_0 : i32, i32
  }
  func.func @transform_3(%arg0: i32) -> (i32, i32) {
    %c0_i32 = arith.constant 0 : i32
    %c0_i32_0 = arith.constant 0 : i32
    %c0_i32_1 = arith.constant 0 : i32
    return %c0_i32, %c0_i32_0 : i32, i32
  }
  func.func @transform_4(%arg0: i32) -> (i32, i32) {
    %c0_i32 = arith.constant 0 : i32
    %c0_i32_0 = arith.constant 0 : i32
    return %c0_i32, %arg0 : i32, i32
  }
}

</mosaic_0001>

<llo_original>
// kernel: tpu_custom_call.1
$region0: #{tpu_custom_call.1}
  #allocation0 [shape = 'u32[]', space=smem, size = 0x4, offset = 0x4, fixed_abs, tag = 'smem constant byte address 0x4 - core index']
  #allocation1 [shape = 'u32[144,128]{1,0:T(1,128)}', space=vmem, size = 0x12000, scoped, tag = 'internal scratch']
  #allocation2 [shape = 'f32[1,1]{1,0:T(1,128)S(1)}', space=vmem, size = 0x200, scoped, tag = 'scoped memory for tpu_custom_call.1']
  %s0 = inlined_call_operand.vmem [shape: f32[8,8], index: 0, kind: input, shape index: {}]
  %s1 = inlined_call_operand.vmem [shape: f32[128,8], index: 1, kind: input, shape index: {}]
  %s2 = inlined_call_operand.vmem [shape: f32[1,128], index: 2, kind: input, shape index: {}]
  %s3 = inlined_call_operand.<no memory space> [shape: f32[1,1], index: 3, kind: input, shape index: {}]
  %s4 = inlined_call_operand.hbm [shape: f32[2,8], index: 4, kind: output, shape index: {}]
  %s5 = sld [smem:[#allocation0]]
  $region26: #{tpu_custom_call.1} parent=0
    _
  %s7 = ssub.s32 1, %s5
  %s8 = scalar_select 0, %s7, %s5
  %v9 = vstv %s3
  %10 = vst [vmem:[#allocation2] sm:$0x1] %v9
  $region1: #{tpu_custom_call.1} parent=0
    #allocation3 [shape = 'u8[1024]{0}', space=vmem, size = 0x400, scoped, tag = 'output window, operand 0, single buffered']
    #allocation4 [shape = 's32[1]{0}', space=sflag, size = 0x4, scoped, tag = 'scoped memory for tpu_custom_call.1']
    %11 = vsyncpa [#allocation4], 0
    // Predicated region
    $region2: #{tpu_custom_call.1} parent=1 // pred_check
      _
    $region3: #{tpu_custom_call.1} parent=1 // pred_check_branch
      %13 = sbr.rel (0) target = $region5
    $region4: #{tpu_custom_call.1} parent=1 // pred_region
      _
    $region5: #{tpu_custom_call.1} parent=1 // pred_fallthru
      _
    // Predicated region
    $region6: #{tpu_custom_call.1} parent=1 // pred_check
      _
    $region7: #{tpu_custom_call.1} parent=1 // pred_check_branch
      %15 = sbr.rel (0) target = $region9
    $region8: #{tpu_custom_call.1} parent=1 // pred_region
      _
    $region9: #{tpu_custom_call.1} parent=1 // pred_fallthru
      _
    // Predicated region
    $region10: #{tpu_custom_call.1} parent=1 // pred_check
      _
    $region11: #{tpu_custom_call.1} parent=1 // pred_check_branch
      %17 = sbr.rel (0) target = $region13
    $region12: #{tpu_custom_call.1} parent=1 // pred_region
      _
    $region13: #{tpu_custom_call.1} parent=1 // pred_fallthru
      _
    // Predicated region
    $region14: #{tpu_custom_call.1} parent=1 // pred_check
      _
    $region15: #{tpu_custom_call.1} parent=1 // pred_check_branch
      %19 = sbr.rel (0) target = $region17
    $region16: #{tpu_custom_call.1} parent=1 // pred_region
      _
    $region17: #{tpu_custom_call.1} parent=1 // pred_fallthru
      _
    %v20 = vld [vmem:[%s1] sm:$0xff]
    %v21 = vld [vmem:[%s1 + $0x8] sm:$0xff]
    %v22 = vld [vmem:[%s1 + $0x10] sm:$0xff]
    %v23 = vld [vmem:[%s1 + $0x18] sm:$0xff]
    %v24 = vld [vmem:[%s1 + $0x20] sm:$0xff]
    %v25 = vld [vmem:[%s1 + $0x28] sm:$0xff]
    %v26 = vld [vmem:[%s1 + $0x30] sm:$0xff]
    %v27 = vld [vmem:[%s1 + $0x38] sm:$0xff]
    %v28 = vld [vmem:[%s1 + $0x40] sm:$0xff]
    %v29 = vld [vmem:[%s1 + $0x48] sm:$0xff]
    %v30 = vld [vmem:[%s1 + $0x50] sm:$0xff]
    %v31 = vld [vmem:[%s1 + $0x58] sm:$0xff]
    %v32 = vld [vmem:[%s1 + $0x60] sm:$0xff]
    %v33 = vld [vmem:[%s1 + $0x68] sm:$0xff]
    %v34 = vld [vmem:[%s1 + $0x70] sm:$0xff]
    %v35 = vld [vmem:[%s1 + $0x78] sm:$0xff]
    %v36 = vld [vmem:[%s0] sm:$0xff]
    %vm37 = vcmask 64512
    %v39 = vsel %vm37, %v20, 0
    %v42 = vsel %vm37, %v21, 0
    %v45 = vsel %vm37, %v22, 0
    %v48 = vsel %vm37, %v23, 0
    %v51 = vsel %vm37, %v24, 0
    %v54 = vsel %vm37, %v25, 0
    %v57 = vsel %vm37, %v26, 0
    %v60 = vsel %vm37, %v27, 0
    %v63 = vsel %vm37, %v28, 0
    %v66 = vsel %vm37, %v29, 0
    %v69 = vsel %vm37, %v30, 0
    %v72 = vsel %vm37, %v31, 0
    %v75 = vsel %vm37, %v32, 0
    %v78 = vsel %vm37, %v33, 0
    %v81 = vsel %vm37, %v34, 0
    %v84 = vsel %vm37, %v35, 0
    %86 = vmatprep.subr.mxu0 0.0
    %87 = vmatpush1.msra.mxu0 %v36
    %88 = vmatprep.subr.mxu0 0.0
    %89 = vmatpush1.msra.mxu0 0.0
    %90 = vmatprep.subr.mxu0 0.0
    %91 = vmatpush1.msra.mxu0 0.0
    %92 = vmatprep.subr.mxu0 0.0
    %93 = vmatpush1.msra.mxu0 0.0
    %94 = vmatprep.subr.mxu0 0.0
    %95 = vmatpush1.msra.mxu0 0.0
    %96 = vmatprep.subr.mxu0 0.0
    %97 = vmatpush1.msra.mxu0 0.0
    %98 = vmatprep.subr.mxu0 0.0
    %99 = vmatpush1.msra.mxu0 0.0
    %100 = vmatprep.subr.mxu0 0.0
    %101 = vmatpush1.msra.mxu0 0.0
    %102 = vmatprep.subr.mxu0 0.0
    %103 = vmatpush1.msra.mxu0 0.0
    %104 = vmatprep.subr.mxu0 0.0
    %105 = vmatpush1.msra.mxu0 0.0
    %106 = vmatprep.subr.mxu0 0.0
    %107 = vmatpush1.msra.mxu0 0.0
    %108 = vmatprep.subr.mxu0 0.0
    %109 = vmatpush1.msra.mxu0 0.0
    %110 = vmatprep.subr.mxu0 0.0
    %111 = vmatpush1.msra.mxu0 0.0
    %112 = vmatprep.subr.mxu0 0.0
    %113 = vmatpush1.msra.mxu0 0.0
    %114 = vmatprep.subr.mxu0 0.0
    %115 = vmatpush1.msra.mxu0 0.0
    %116 = vmatprep.subr.mxu0 0.0
    %117 = vmatpush1.msra.mxu0 0.0
    %118 = vmatprep.subr.mxu0 0.0
    %119 = vmatpush1.msra.mxu0 0.0
    %120 = vmatprep.subr.mxu0 0.0
    %121 = vmatpush1.msra.mxu0 0.0
    %122 = vmatprep.subr.mxu0 0.0
    %123 = vmatpush1.msra.mxu0 0.0
    %124 = vmatprep.subr.mxu0 0.0
    %125 = vmatpush1.msra.mxu0 0.0
    %126 = vmatprep.subr.mxu0 0.0
    %127 = vmatpush1.msra.mxu0 0.0
    %128 = vmatprep.subr.mxu0 0.0
    %129 = vmatpush1.msra.mxu0 0.0
    %130 = vmatprep.subr.mxu0 0.0
    %131 = vmatpush1.msra.mxu0 0.0
    %132 = vmatprep.subr.mxu0 0.0
    %133 = vmatpush1.msra.mxu0 0.0
    %134 = vmatprep.subr.mxu0 0.0
    %135 = vmatpush1.msra.mxu0 0.0
    %136 = vmatprep.subr.mxu0 0.0
    %137 = vmatpush1.msra.mxu0 0.0
    %138 = vmatprep.subr.mxu0 0.0
    %139 = vmatpush1.msra.mxu0 0.0
    %140 = vmatprep.subr.mxu0 0.0
    %141 = vmatpush1.msra.mxu0 0.0
    %142 = vmatprep.subr.mxu0 0.0
    %143 = vmatpush1.msra.mxu0 0.0
    %144 = vmatprep.subr.mxu0 0.0
    %145 = vmatpush1.msra.mxu0 0.0
    %146 = vmatprep.subr.mxu0 0.0
    %147 = vmatpush1.msra.mxu0 0.0
    %148 = vmatprep.subr.mxu0 0.0
    %149 = vmatpush1.msra.mxu0 0.0
    %150 = vmatprep.mubr.f32.mxu0 0.0
    %151 = vmatmul.mubr.f32.gmra.mrb[0].mxu0 %v39
    %v152 = vpop.f32.mrb[0].mxu0
    %v153 = vadd.f32 0.0, %v152
    %v154 = vpop.f32.mrb[0].mxu0
    %155 = vmatprep.mubr.f32.mxu0 0.0
    %156 = vmatmul.mubr.f32.gmra.mrb[0].mxu0 %v42
    %v157 = vpop.f32.mrb[0].mxu0
    %v158 = vadd.f32 0.0, %v157
    %v159 = vpop.f32.mrb[0].mxu0
    %160 = vmatprep.mubr.f32.mxu0 0.0
    %161 = vmatmul.mubr.f32.gmra.mrb[0].mxu0 %v45
    %v162 = vpop.f32.mrb[0].mxu0
    %v163 = vadd.f32 0.0, %v162
    %v164 = vpop.f32.mrb[0].mxu0
    %165 = vmatprep.mubr.f32.mxu0 0.0
    %166 = vmatmul.mubr.f32.gmra.mrb[0].mxu0 %v48
    %v167 = vpop.f32.mrb[0].mxu0
    %v168 = vadd.f32 0.0, %v167
    %v169 = vpop.f32.mrb[0].mxu0
    %170 = vmatprep.mubr.f32.mxu0 0.0
    %171 = vmatmul.mubr.f32.gmra.mrb[0].mxu0 %v51
    %v172 = vpop.f32.mrb[0].mxu0
    %v173 = vadd.f32 0.0, %v172
    %v174 = vpop.f32.mrb[0].mxu0
    %175 = vmatprep.mubr.f32.mxu0 0.0
    %176 = vmatmul.mubr.f32.gmra.mrb[0].mxu0 %v54
    %v177 = vpop.f32.mrb[0].mxu0
    %v178 = vadd.f32 0.0, %v177
    %v179 = vpop.f32.mrb[0].mxu0
    %180 = vmatprep.mubr.f32.mxu0 0.0
    %181 = vmatmul.mubr.f32.gmra.mrb[0].mxu0 %v57
    %v182 = vpop.f32.mrb[0].mxu0
    %v183 = vadd.f32 0.0, %v182
    %v184 = vpop.f32.mrb[0].mxu0
    %185 = vmatprep.mubr.f32.mxu0 0.0
    %186 = vmatmul.mubr.f32.gmra.mrb[0].mxu0 %v60
    %v187 = vpop.f32.mrb[0].mxu0
    %v188 = vadd.f32 0.0, %v187
    %v189 = vpop.f32.mrb[0].mxu0
    %190 = vmatprep.mubr.f32.mxu0 0.0
    %191 = vmatmul.mubr.f32.gmra.mrb[0].mxu0 %v63
    %v192 = vpop.f32.mrb[0].mxu0
    %v193 = vadd.f32 0.0, %v192
    %v194 = vpop.f32.mrb[0].mxu0
    %195 = vmatprep.mubr.f32.mxu0 0.0
    %196 = vmatmul.mubr.f32.gmra.mrb[0].mxu0 %v66
    %v197 = vpop.f32.mrb[0].mxu0
    %v198 = vadd.f32 0.0, %v197
    %v199 = vpop.f32.mrb[0].mxu0
    %200 = vmatprep.mubr.f32.mxu0 0.0
    %201 = vmatmul.mubr.f32.gmra.mrb[0].mxu0 %v69
    %v202 = vpop.f32.mrb[0].mxu0
    %v203 = vadd.f32 0.0, %v202
    %v204 = vpop.f32.mrb[0].mxu0
    %205 = vmatprep.mubr.f32.mxu0 0.0
    %206 = vmatmul.mubr.f32.gmra.mrb[0].mxu0 %v72
    %v207 = vpop.f32.mrb[0].mxu0
    %v208 = vadd.f32 0.0, %v207
    %v209 = vpop.f32.mrb[0].mxu0
    %210 = vmatprep.mubr.f32.mxu0 0.0
    %211 = vmatmul.mubr.f32.gmra.mrb[0].mxu0 %v75
    %v212 = vpop.f32.mrb[0].mxu0
    %v213 = vadd.f32 0.0, %v212
    %v214 = vpop.f32.mrb[0].mxu0
    %215 = vmatprep.mubr.f32.mxu0 0.0
    %216 = vmatmul.mubr.f32.gmra.mrb[0].mxu0 %v78
    %v217 = vpop.f32.mrb[0].mxu0
    %v218 = vadd.f32 0.0, %v217
    %v219 = vpop.f32.mrb[0].mxu0
    %220 = vmatprep.mubr.f32.mxu0 0.0
    %221 = vmatmul.mubr.f32.gmra.mrb[0].mxu0 %v81
    %v222 = vpop.f32.mrb[0].mxu0
    %v223 = vadd.f32 0.0, %v222
    %v224 = vpop.f32.mrb[0].mxu0
    %225 = vmatprep.mubr.f32.mxu0 0.0
    %226 = vmatmul.mubr.f32.gmra.mrb[0].mxu0 %v84
    %v227 = vpop.f32.mrb[0].mxu0
    %v228 = vadd.f32 0.0, %v227
    %v229 = vpop.f32.mrb[0].mxu0
    %230 = vdwg.mxu0
    %v231 = vmax.f32 %v153, 0.0
    %v232 = vmax.f32 %v158, 0.0
    %v233 = vmax.f32 %v163, 0.0
    %v234 = vmax.f32 %v168, 0.0
    %v235 = vmax.f32 %v173, 0.0
    %v236 = vmax.f32 %v178, 0.0
    %v237 = vmax.f32 %v183, 0.0
    %v238 = vmax.f32 %v188, 0.0
    %v239 = vmax.f32 %v193, 0.0
    %v240 = vmax.f32 %v198, 0.0
    %v241 = vmax.f32 %v203, 0.0
    %v242 = vmax.f32 %v208, 0.0
    %v243 = vmax.f32 %v213, 0.0
    %v244 = vmax.f32 %v218, 0.0
    %v245 = vmax.f32 %v223, 0.0
    %v246 = vmax.f32 %v228, 0.0
    %v247 = vld [vmem:[%s2] sm:$0x1]
    %v248 = vld [vmem:[#allocation2] sm:$0x1]
    %250 = vset.pattern.permute.xlu0 0
    %251 = vperm.xlu0 %250, %v248
    %v252 = vpop.permute.xlu0 %251
    %v254 = vlaneseq
    %v255 = vshrl.u32 %v254, 7
    %v256 = vsub.s32 0, %v255
    %v257 = vrot.slane %v252, %v256
    %258 = vmatprep.subr.mxu0 0.0
    %259 = vmatpush1.msra.mxu0 %v231
    %260 = vmatprep.subr.mxu0 0.0
    %261 = vmatpush1.msra.mxu0 %v232
    %262 = vmatprep.subr.mxu0 0.0
    %263 = vmatpush1.msra.mxu0 %v233
    %264 = vmatprep.subr.mxu0 0.0
    %265 = vmatpush1.msra.mxu0 %v234
    %266 = vmatprep.subr.mxu0 0.0
    %267 = vmatpush1.msra.mxu0 %v235
    %268 = vmatprep.subr.mxu0 0.0
    %269 = vmatpush1.msra.mxu0 %v236
    %270 = vmatprep.subr.mxu0 0.0
    %271 = vmatpush1.msra.mxu0 %v237
    %272 = vmatprep.subr.mxu0 0.0
    %273 = vmatpush1.msra.mxu0 %v238
    %274 = vmatprep.subr.mxu0 0.0
    %275 = vmatpush1.msra.mxu0 %v239
    %276 = vmatprep.subr.mxu0 0.0
    %277 = vmatpush1.msra.mxu0 %v240
    %278 = vmatprep.subr.mxu0 0.0
    %279 = vmatpush1.msra.mxu0 %v241
    %280 = vmatprep.subr.mxu0 0.0
    %281 = vmatpush1.msra.mxu0 %v242
    %282 = vmatprep.subr.mxu0 0.0
    %283 = vmatpush1.msra.mxu0 %v243
    %284 = vmatprep.subr.mxu0 0.0
    %285 = vmatpush1.msra.mxu0 %v244
    %286 = vmatprep.subr.mxu0 0.0
    %287 = vmatpush1.msra.mxu0 %v245
    %288 = vmatprep.subr.mxu0 0.0
    %289 = vmatpush1.msra.mxu0 %v246
    %290 = vmatprep.subr.mxu0 0.0
    %291 = vmatpush1.msra.mxu0 0.0
    %292 = vmatprep.subr.mxu0 0.0
    %293 = vmatpush1.msra.mxu0 0.0
    %294 = vmatprep.subr.mxu0 0.0
    %295 = vmatpush1.msra.mxu0 0.0
    %296 = vmatprep.subr.mxu0 0.0
    %297 = vmatpush1.msra.mxu0 0.0
    %298 = vmatprep.subr.mxu0 0.0
    %299 = vmatpush1.msra.mxu0 0.0
    %300 = vmatprep.subr.mxu0 0.0
    %301 = vmatpush1.msra.mxu0 0.0
    %302 = vmatprep.subr.mxu0 0.0
    %303 = vmatpush1.msra.mxu0 0.0
    %304 = vmatprep.subr.mxu0 0.0
    %305 = vmatpush1.msra.mxu0 0.0
    %306 = vmatprep.subr.mxu0 0.0
    %307 = vmatpush1.msra.mxu0 0.0
    %308 = vmatprep.subr.mxu0 0.0
    %309 = vmatpush1.msra.mxu0 0.0
    %310 = vmatprep.subr.mxu0 0.0
    %311 = vmatpush1.msra.mxu0 0.0
    %312 = vmatprep.subr.mxu0 0.0
    %313 = vmatpush1.msra.mxu0 0.0
    %314 = vmatprep.subr.mxu0 0.0
    %315 = vmatpush1.msra.mxu0 0.0
    %316 = vmatprep.subr.mxu0 0.0
    %317 = vmatpush1.msra.mxu0 0.0
    %318 = vmatprep.subr.mxu0 0.0
    %319 = vmatpush1.msra.mxu0 0.0
    %320 = vmatprep.subr.mxu0 0.0
    %321 = vmatpush1.msra.mxu0 0.0
    %322 = vmatprep.mubr.f32.mxu0 0.0
    %323 = vmatmul.mubr.f32.gmra.mrb[0].mxu0 %v247
    %v324 = vpop.f32.mrb[0].mxu0
    %v325 = vadd.f32 %v257, %v324
    %v326 = vpop.f32.mrb[0].mxu0
    %327 = vdwg.mxu0
    %v328 = vmul.f32 %v325, 0.5
    %v329 = vtanh.pop %v328
    %v330 = vadd.f32 %v329, 1.0
    %v331 = vmul.f32 %v330, 0.5
    %v332 = vsub.f32 1.0, %v331
    %vm333 = vcmask 57344
    %334 = vst.msk [vmem:[#allocation3] sm:$0x1] %vm333, %v332
    %335 = vst.msk [vmem:[#allocation3 + $0x1] sm:$0x1] %vm333, %v331
    // Predicated region
    $region18: #{tpu_custom_call.1} parent=1 // pred_check
      _
    $region19: #{tpu_custom_call.1} parent=1 // pred_check_branch
      %337 = sbr.rel (0) target = $region21
    $region20: #{tpu_custom_call.1} parent=1 // pred_region
      %s339 = ssub.s32 32, 32
      %340 = vsyncadd [#allocation4], %s339
      %s342 = sshll.u32 [#allocation3], 4
      %s343 = int_to_ptr.vmem [resolvable:$true] %s342
      %345 = dma.vmem_to_hbm [thread:$0]  %s343, 32, %s4, [#allocation4]
    $region21: #{tpu_custom_call.1} parent=1 // pred_fallthru
      _
    // Predicated region
    $region22: #{tpu_custom_call.1} parent=1 // pred_check
      _
    $region23: #{tpu_custom_call.1} parent=1 // pred_check_branch
      %347 = sbr.rel (0) target = $region25
    $region24: #{tpu_custom_call.1} parent=1 // pred_region
      %348 = dma.done [#allocation4], 32
    $region25: #{tpu_custom_call.1} parent=1 // pred_fallthru
      _
    %349 = vsyncpa [#allocation4], 1

</llo_original>
